<compile_context>
chip_gen: v5e
topology: v5e:2x2
jax: 0.10.0
libtpu: 0.0.40
codegen_flags: <defaults>
</compile_context>

<pallas_src>
import jax
import jax.numpy as jnp
from jax import lax
from jax.experimental import pallas as pl
from jax.experimental.pallas import tpu as pltpu

# ---- synthetic module configuration (mirrors SoftQNetwork.__init__) ----------
CAT_COLS = ["bus_id", "station_id", "time_period", "direction"]
CAT_SIZES = {"bus_id": 8, "station_id": 6, "time_period": 18, "direction": 2}
EMB_DIMS = {c: min(50, CAT_SIZES[c] // 2) for c in CAT_COLS}   # 4, 3, 9, 1 -> 17
N_CAT = len(CAT_COLS)
NUM_NUMERIC = 7
NUM_ACTIONS = 8
STATE_DIM = N_CAT + NUM_NUMERIC                                # 11
NUM_INPUTS = sum(EMB_DIMS.values()) + NUM_NUMERIC              # 17 + 7 = 24
HIDDEN = 32
INIT_W = 0.003


def _round_up(x, m):
    return (x + m - 1) // m * m


def _cdiv(a, b):
    return -(-a // b)


# ---- stacked embedding-table geometry ----------------------------------------
EMB_ROW_OFFSETS, EMB_COL_OFFSETS = [], []
_r, _c = 0, 0
for _col in CAT_COLS:
    EMB_ROW_OFFSETS.append(_r)
    EMB_COL_OFFSETS.append(_c)
    _r += CAT_SIZES[_col]
    _c += EMB_DIMS[_col]
EMB_ROWS = _r                          # 34 stacked embedding rows
EMB_TOTAL = _c                         # 17 embedding features
EMB_ROWS_PAD = _round_up(EMB_ROWS, 8)  # 40

# Fused layer-1 activation rows (transposed layout: features on sublanes).
STATE_PAD = 16                         # state lifted from 11 -> 16 rows
X_ONEHOT = 0                           # rows  0..39 : combined one-hot
X_STATE = EMB_ROWS_PAD                 # rows 40..55 : raw state (cat rows get 0 weight)
X_ACT = X_STATE + STATE_PAD            # rows 56..63 : action
X_TOTAL = X_ACT + NUM_ACTIONS          # 64

# ---- packed-parameter blob layout (transposed weights, [rows, 64]) ------------
PCOLS = X_TOTAL                        # 64 lanes (full-width slices only)
ROW_W1 = 0                             # [32, 64]  W1_fused^T  (b1 folded into cols 0..33)
ROW_W2 = ROW_W1 + HIDDEN               # [32, 64]  W2^T in cols 0..31, b2 in col 32
ROW_W3 = ROW_W2 + HIDDEN               # [32, 64]  w3 in column 0
ROW_B3 = ROW_W3 + HIDDEN               # row 96    b3 at [ROW_B3, 0]
PARAM_ROWS = _round_up(ROW_B3 + 1, 8)  # 104 rows x 64 cols f32 (~26 KB)


# ---- Pallas kernel: one-hot gather + fused 3-layer MLP (batch on lanes) --------
def _qnet_kernel(state_ref, act_ref, p_ref, o_ref):
    sT = state_ref[...]                              # [16, bm] f32
    bm = sT.shape[1]
    cat = sT[:N_CAT, :].astype(jnp.int32)            # [4, bm]  truncation, like .long()

    # Combined one-hot over the 4 stacked embedding tables: OR the 4 compare
    # masks (disjoint row ranges) and cast once — no zeros init, no f32 adds.
    rows = lax.broadcasted_iota(jnp.int32, (EMB_ROWS_PAD, bm), 0)
    m = rows == (cat[0:1, :] + EMB_ROW_OFFSETS[0])
    for c in range(1, N_CAT):                        # static 3 extra compares
        m = m | (rows == (cat[c:c + 1, :] + EMB_ROW_OFFSETS[c]))
    onehot = m.astype(jnp.float32)                   # [40, bm]

    # Layer 1 (single fused matmul, b1 folded into the one-hot columns):
    #   h1^T = relu( W1_fused^T @ [onehot ; state ; action] )
    xT = jnp.concatenate([onehot, sT, act_ref[...]], axis=0)      # [64, bm]
    h = jnp.dot(p_ref[ROW_W1:ROW_W1 + HIDDEN, :], xT,
                preferred_element_type=jnp.float32)
    h = jnp.maximum(h, 0.0)                          # [32, bm]

    # Layer 2: b2 folded as column 32 of W2^T against a constant-ones row block
    # (columns 33..63 of the weight section are zero, so the extra ones rows
    # contribute nothing).
    h = jnp.concatenate([h, jnp.ones_like(h)], axis=0)            # [64, bm]
    h = jnp.dot(p_ref[ROW_W2:ROW_W2 + HIDDEN, :], h,
                preferred_element_type=jnp.float32)
    h = jnp.maximum(h, 0.0)                          # [32, bm]

    # Layer 3: 32 -> 1 projection as VPU multiply + sublane reduction;
    # one lane-dense [1, bm] store.
    w3 = p_ref[ROW_W3:ROW_W3 + HIDDEN, 0:1]          # [32, 1]
    b3 = p_ref[ROW_B3:ROW_B3 + 1, 0:1]               # [1, 1]
    o_ref[...] = jnp.sum(h * w3, axis=0, keepdims=True) + b3


def soft_q_forward(state, action, packed_params, *, block_m=2048):
    """state: [B, 11] f32 (first 4 cols are integer-valued categorical codes)
       action: [B, 8] f32
       packed_params: [PARAM_ROWS, PCOLS] f32 from pack_params()
       returns: [B, 1] f32 Q-values."""
    B = state.shape[0]
    # Balanced, 128-lane-aligned batch blocks; a single block for SAC-sized
    # batches (B <= block_m).  Multiple blocks only when B is large, so the
    # "parallel" grid axis can shard across v7x's two TensorCores.
    nblk = max(1, _cdiv(B, block_m))
    bm = _round_up(_cdiv(B, nblk), 128)
    Bp = bm * nblk

    # Transposed, feature-on-sublane inputs (layout plumbing outside the kernel).
    stateT = jnp.zeros((STATE_PAD, Bp), jnp.float32).at[:STATE_DIM, :B].set(
        state.astype(jnp.float32).T)
    actionT = jnp.zeros((NUM_ACTIONS, Bp), jnp.float32).at[:, :B].set(
        action.astype(jnp.float32).T)

    outT = pl.pallas_call(
        _qnet_kernel,
        out_shape=jax.ShapeDtypeStruct((1, Bp), jnp.float32),
        grid=(nblk,),
        in_specs=[
            pl.BlockSpec((STATE_PAD, bm), lambda i: (0, i)),
            pl.BlockSpec((NUM_ACTIONS, bm), lambda i: (0, i)),
            pl.BlockSpec((PARAM_ROWS, PCOLS), lambda i: (0, 0)),   # resident params
        ],
        out_specs=pl.BlockSpec((1, bm), lambda i: (0, i)),
        compiler_params=pltpu.CompilerParams(
            dimension_semantics=("parallel",)),      # v7x: shard batch over 2 TCs
    )(stateT, actionT, packed_params)
    return outT[0, :B].reshape(B, 1)


# ---- deterministic parameter init (shapes per SoftQNetwork.__init__) ----------
def init_params(key):
    keys = jax.random.split(key, 16)
    ki = 0
    params = {}
    for c in CAT_COLS:                               # nn.Embedding ~ N(0,1)
        params[f"emb_{c}"] = jax.random.normal(
            keys[ki], (CAT_SIZES[c], EMB_DIMS[c]), jnp.float32)
        ki += 1
    d_in = NUM_INPUTS + NUM_ACTIONS                  # 32
    lim1 = 1.0 / float(d_in) ** 0.5
    params["w1"] = jax.random.uniform(keys[ki], (d_in, HIDDEN), jnp.float32, -lim1, lim1); ki += 1
    params["b1"] = jax.random.uniform(keys[ki], (1, HIDDEN), jnp.float32, -lim1, lim1); ki += 1
    lim2 = 1.0 / float(HIDDEN) ** 0.5
    params["w2"] = jax.random.uniform(keys[ki], (HIDDEN, HIDDEN), jnp.float32, -lim2, lim2); ki += 1
    params["b2"] = jax.random.uniform(keys[ki], (1, HIDDEN), jnp.float32, -lim2, lim2); ki += 1
    params["w3"] = jax.random.uniform(keys[ki], (HIDDEN, 1), jnp.float32, -INIT_W, INIT_W); ki += 1
    params["b3"] = jax.random.uniform(keys[ki], (1, 1), jnp.float32, -INIT_W, INIT_W); ki += 1
    return params


def pack_params(params):
    """One-time packing into a single transposed [PARAM_ROWS, 64] VMEM blob."""
    hp = lax.Precision.HIGHEST
    # Block-diagonal stacked embedding matrix E: [34, 17].
    E = jnp.zeros((EMB_ROWS, EMB_TOTAL), jnp.float32)
    for i, col in enumerate(CAT_COLS):
        E = E.at[EMB_ROW_OFFSETS[i]:EMB_ROW_OFFSETS[i] + CAT_SIZES[col],
                 EMB_COL_OFFSETS[i]:EMB_COL_OFFSETS[i] + EMB_DIMS[col]].set(
            params[f"emb_{col}"])
    ew1 = jnp.dot(E, params["w1"][:EMB_TOTAL, :], precision=hp)     # [34, 32]
    # Fold b1: each sample selects exactly N_CAT one-hot rows, so b1/N_CAT per
    # selected column sums back to b1.
    ew1 = ew1 + params["b1"][0] / float(N_CAT)

    blob = jnp.zeros((PARAM_ROWS, PCOLS), jnp.float32)
    # Fused layer-1 weights, transposed: [32 hidden, 64 input-feature columns].
    blob = blob.at[ROW_W1:ROW_W1 + HIDDEN,
                   X_ONEHOT:X_ONEHOT + EMB_ROWS].set(ew1.T)
    # Numeric part of state (columns under the 4 raw cat-code rows stay zero).
    blob = blob.at[ROW_W1:ROW_W1 + HIDDEN,
                   X_STATE + N_CAT:X_STATE + N_CAT + NUM_NUMERIC].set(
        params["w1"][EMB_TOTAL:EMB_TOTAL + NUM_NUMERIC, :].T)
    blob = blob.at[ROW_W1:ROW_W1 + HIDDEN,
                   X_ACT:X_ACT + NUM_ACTIONS].set(
        params["w1"][EMB_TOTAL + NUM_NUMERIC:, :].T)
    # Layer-2 weights transposed + b2 folded as column 32 (ones-row trick).
    blob = blob.at[ROW_W2:ROW_W2 + HIDDEN, 0:HIDDEN].set(params["w2"].T)
    blob = blob.at[ROW_W2:ROW_W2 + HIDDEN, HIDDEN].set(params["b2"][0])
    # w3 as a column, b3 as a scalar.
    blob = blob.at[ROW_W3:ROW_W3 + HIDDEN, 0].set(params["w3"][:, 0])
    blob = blob.at[ROW_B3, 0].set(params["b3"][0, 0])
    return blob


def _reference_forward(state, action, params):
    """Pure-JAX reference of the original PyTorch forward (for correctness)."""
    hp = lax.Precision.HIGHEST
    cat_idx = state[:, :N_CAT].astype(jnp.int32)
    num_tensor = state[:, N_CAT:]
    embeds = [jnp.take(params[f"emb_{c}"], cat_idx[:, i], axis=0)
              for i, c in enumerate(CAT_COLS)]
    x = jnp.concatenate(embeds + [num_tensor, action], axis=1)
    h = jax.nn.relu(jnp.dot(x, params["w1"], precision=hp) + params["b1"])
    h = jax.nn.relu(jnp.dot(h, params["w2"], precision=hp) + params["b2"])
    return jnp.dot(h, params["w3"], precision=hp) + params["b3"]


if __name__ == "__main__":
    key = jax.random.PRNGKey(0)
    k_param, k_cat, k_num, k_act = jax.random.split(key, 4)

    params = init_params(k_param)
    packed = pack_params(params)                     # one-time packing

    BATCH = 64
    maxes = jnp.array([CAT_SIZES[c] for c in CAT_COLS], dtype=jnp.int32)
    cat_part = jax.random.randint(k_cat, (BATCH, N_CAT), 0, maxes).astype(jnp.float32)
    num_part = jax.random.normal(k_num, (BATCH, NUM_NUMERIC), jnp.float32)
    state = jnp.concatenate([cat_part, num_part], axis=1)   # [B, 11]
    action = jax.random.normal(k_act, (BATCH, NUM_ACTIONS), jnp.float32)

    q_ref = _reference_forward(state, action, params)

    # Default policy: one balanced 128-lane block, single grid step.
    q = jax.block_until_ready(soft_q_forward(state, action, packed))
    assert q.shape == (BATCH, 1)
    assert jnp.allclose(q, q_ref, atol=1e-3, rtol=1e-3), "mismatch vs JAX reference"

    # Multi-block path (what a large batch on v7x would use): 2 parallel blocks.
    q2 = jax.block_until_ready(soft_q_forward(state, action, packed, block_m=32))
    assert jnp.allclose(q2, q_ref, atol=1e-3, rtol=1e-3), "mismatch (multi-block)"

    print("KERNEL_OK")
</pallas_src>

<mosaic_0001>
module attributes {stable_mosaic.version = 11 : i64} {
  func.func @_qnet_kernel(%arg0: i32, %arg1: memref<16x128xf32, #tpu.memory_space<vmem>>, %arg2: memref<8x128xf32, #tpu.memory_space<vmem>>, %arg3: memref<104x64xf32, #tpu.memory_space<vmem>>, %arg4: memref<1x128xf32, #tpu.memory_space<vmem>>) attributes {dimension_semantics = [#tpu.dimension_semantics<parallel>], iteration_bounds = array<i64: 1>, scalar_prefetch = 0 : i64, scratch_operands = 0 : i64, tpu.core_type = #tpu.core_type<tc>, window_params = [{transform_indices = @transform_0, window_bounds = array<i64: 16, 128>}, {transform_indices = @transform_1, window_bounds = array<i64: 8, 128>}, {pipeline_mode = #tpu.pipeline_mode<synchronous>, transform_indices = @transform_2, window_bounds = array<i64: 104, 64>}, {transform_indices = @transform_3, window_bounds = array<i64: 1, 128>}]} {
    %c0 = arith.constant 0 : index
    %c0_0 = arith.constant 0 : index
    %0 = vector.load %arg1[%c0, %c0_0] : memref<16x128xf32, #tpu.memory_space<vmem>>, vector<16x128xf32>
    %1 = vector.extract_strided_slice %0 {offsets = [0, 0], sizes = [4, 128], strides = [1, 1]} : vector<16x128xf32> to vector<4x128xf32>
    %2 = arith.fptosi %1 : vector<4x128xf32> to vector<4x128xi32>
    %3 = tpu.iota {dimensions = array<i32: 0>} : vector<40x128xi32>
    %4 = vector.extract_strided_slice %2 {offsets = [0, 0], sizes = [1, 128], strides = [1, 1]} : vector<4x128xi32> to vector<1x128xi32>
    %c0_i32 = arith.constant 0 : i32
    %5 = vector.broadcast %c0_i32 : i32 to vector<1x128xi32>
    %6 = arith.addi %4, %5 : vector<1x128xi32>
    %7 = vector.broadcast %6 : vector<1x128xi32> to vector<40x128xi32>
    %8 = arith.cmpi eq, %3, %7 : vector<40x128xi32>
    %9 = vector.extract_strided_slice %2 {offsets = [1, 0], sizes = [1, 128], strides = [1, 1]} : vector<4x128xi32> to vector<1x128xi32>
    %c8_i32 = arith.constant 8 : i32
    %10 = vector.broadcast %c8_i32 : i32 to vector<1x128xi32>
    %11 = arith.addi %9, %10 : vector<1x128xi32>
    %12 = vector.broadcast %11 : vector<1x128xi32> to vector<40x128xi32>
    %13 = arith.cmpi eq, %3, %12 : vector<40x128xi32>
    %14 = arith.ori %8, %13 : vector<40x128xi1>
    %15 = vector.extract_strided_slice %2 {offsets = [2, 0], sizes = [1, 128], strides = [1, 1]} : vector<4x128xi32> to vector<1x128xi32>
    %c14_i32 = arith.constant 14 : i32
    %16 = vector.broadcast %c14_i32 : i32 to vector<1x128xi32>
    %17 = arith.addi %15, %16 : vector<1x128xi32>
    %18 = vector.broadcast %17 : vector<1x128xi32> to vector<40x128xi32>
    %19 = arith.cmpi eq, %3, %18 : vector<40x128xi32>
    %20 = arith.ori %14, %19 : vector<40x128xi1>
    %21 = vector.extract_strided_slice %2 {offsets = [3, 0], sizes = [1, 128], strides = [1, 1]} : vector<4x128xi32> to vector<1x128xi32>
    %c32_i32 = arith.constant 32 : i32
    %22 = vector.broadcast %c32_i32 : i32 to vector<1x128xi32>
    %23 = arith.addi %21, %22 : vector<1x128xi32>
    %24 = vector.broadcast %23 : vector<1x128xi32> to vector<40x128xi32>
    %25 = arith.cmpi eq, %3, %24 : vector<40x128xi32>
    %26 = arith.ori %20, %25 : vector<40x128xi1>
    %27 = arith.extui %26 : vector<40x128xi1> to vector<40x128xi32>
    %28 = arith.sitofp %27 : vector<40x128xi32> to vector<40x128xf32>
    %c0_1 = arith.constant 0 : index
    %c0_2 = arith.constant 0 : index
    %29 = vector.load %arg2[%c0_1, %c0_2] : memref<8x128xf32, #tpu.memory_space<vmem>>, vector<8x128xf32>
    %30 = tpu.concatenate %28, %0, %29 in 0 : vector<40x128xf32>, vector<16x128xf32>, vector<8x128xf32> -> vector<64x128xf32>
    %c0_3 = arith.constant 0 : index
    %c0_4 = arith.constant 0 : index
    %31 = vector.load %arg3[%c0_3, %c0_4] : memref<104x64xf32, #tpu.memory_space<vmem>>, vector<32x64xf32>
    %cst = arith.constant dense<0.000000e+00> : vector<32x128xf32>
    %32 = tpu.matmul %31, %30, %cst {dimension_numbers = #tpu.dot_dimension_numbers<[1], [0], [0], [1], [0, 0, 1, 1], [], []>} : vector<32x64xf32>, vector<64x128xf32>, vector<32x128xf32> -> vector<32x128xf32>
    %cst_5 = arith.constant 0.000000e+00 : f32
    %33 = vector.broadcast %cst_5 : f32 to vector<32x128xf32>
    %34 = arith.maximumf %32, %33 : vector<32x128xf32>
    %cst_6 = arith.constant 1.000000e+00 : f32
    %35 = vector.broadcast %cst_6 : f32 to vector<32x128xf32>
    %36 = tpu.concatenate %34, %35 in 0 : vector<32x128xf32>, vector<32x128xf32> -> vector<64x128xf32>
    %c32 = arith.constant 32 : index
    %c0_7 = arith.constant 0 : index
    %37 = vector.load %arg3[%c32, %c0_7] : memref<104x64xf32, #tpu.memory_space<vmem>>, vector<32x64xf32>
    %cst_8 = arith.constant dense<0.000000e+00> : vector<32x128xf32>
    %38 = tpu.matmul %37, %36, %cst_8 {dimension_numbers = #tpu.dot_dimension_numbers<[1], [0], [0], [1], [0, 0, 1, 1], [], []>} : vector<32x64xf32>, vector<64x128xf32>, vector<32x128xf32> -> vector<32x128xf32>
    %cst_9 = arith.constant 0.000000e+00 : f32
    %39 = vector.broadcast %cst_9 : f32 to vector<32x128xf32>
    %40 = arith.maximumf %38, %39 : vector<32x128xf32>
    %c64 = arith.constant 64 : index
    %c0_10 = arith.constant 0 : index
    %41 = vector.load %arg3[%c64, %c0_10] : memref<104x64xf32, #tpu.memory_space<vmem>>, vector<32x1xf32>
    %c96 = arith.constant 96 : index
    %c0_11 = arith.constant 0 : index
    %42 = vector.load %arg3[%c96, %c0_11] : memref<104x64xf32, #tpu.memory_space<vmem>>, vector<1x1xf32>
    %43 = vector.broadcast %41 : vector<32x1xf32> to vector<32x128xf32>
    %44 = arith.mulf %40, %43 : vector<32x128xf32>
    %cst_12 = arith.constant dense<0.000000e+00> : vector<128xf32>
    %45 = vector.multi_reduction <add>, %44, %cst_12 [0] : vector<32x128xf32> to vector<128xf32>
    %46 = vector.shape_cast %45 : vector<128xf32> to vector<1x128xf32>
    %47 = vector.broadcast %42 : vector<1x1xf32> to vector<1x128xf32>
    %48 = arith.addf %46, %47 : vector<1x128xf32>
    %c0_13 = arith.constant 0 : index
    %c0_14 = arith.constant 0 : index
    %49 = vector.load %arg4[%c0_13, %c0_14] : memref<1x128xf32, #tpu.memory_space<vmem>>, vector<1x128xf32>
    tpu.vector_store %arg4[%c0_13, %c0_14], %48 {strides = array<i32>} : memref<1x128xf32, #tpu.memory_space<vmem>>, vector<1x128xf32>,
    return
  }
  func.func @transform_0(%arg0: i32) -> (i32, i32) {
    %c0_i32 = arith.constant 0 : i32
    %c0_i32_0 = arith.constant 0 : i32
    return %c0_i32, %arg0 : i32, i32
  }
  func.func @transform_1(%arg0: i32) -> (i32, i32) {
    %c0_i32 = arith.constant 0 : i32
    %c0_i32_0 = arith.constant 0 : i32
    return %c0_i32, %arg0 : i32, i32
  }
  func.func @transform_2(%arg0: i32) -> (i32, i32) {
    %c0_i32 = arith.constant 0 : i32
    %c0_i32_0 = arith.constant 0 : i32
    %c0_i32_1 = arith.constant 0 : i32
    return %c0_i32, %c0_i32_0 : i32, i32
  }
  func.func @transform_3(%arg0: i32) -> (i32, i32) {
    %c0_i32 = arith.constant 0 : i32
    %c0_i32_0 = arith.constant 0 : i32
    return %c0_i32, %arg0 : i32, i32
  }
}

</mosaic_0001>

<llo_original>
// kernel: tpu_custom_call.1
$region0: #{tpu_custom_call.1}
  #allocation0 [shape = 'u32[]', space=smem, size = 0x4, offset = 0x4, fixed_abs, tag = 'smem constant byte address 0x4 - core index']
  #allocation1 [shape = 'u32[72,128]{1,0:T(1,128)}', space=vmem, size = 0x9000, scoped, tag = 'internal scratch']
  %s0 = inlined_call_operand.vmem [shape: f32[16,128], index: 0, kind: input, shape index: {}]
  %s1 = inlined_call_operand.vmem [shape: f32[8,128], index: 1, kind: input, shape index: {}]
  %s2 = inlined_call_operand.vmem [shape: f32[104,64], index: 2, kind: input, shape index: {}]
  %s3 = inlined_call_operand.hbm [shape: f32[1,128], index: 3, kind: output, shape index: {}]
  %s4 = sld [smem:[#allocation0]]
  $region22: #{tpu_custom_call.1} parent=0
    _
  %s6 = ssub.s32 1, %s4
  %s7 = scalar_select 0, %s6, %s4
  $region1: #{tpu_custom_call.1} parent=0
    #allocation2 [shape = 'u8[512]{0}', space=vmem, size = 0x400, scoped, tag = 'output window, operand 0, single buffered']
    #allocation3 [shape = 's32[1]{0}', space=sflag, size = 0x4, scoped, tag = 'scoped memory for tpu_custom_call.1']
    %8 = vsyncpa [#allocation3], 0
    // Predicated region
    $region2: #{tpu_custom_call.1} parent=1 // pred_check
      _
    $region3: #{tpu_custom_call.1} parent=1 // pred_check_branch
      %10 = sbr.rel (0) target = $region5
    $region4: #{tpu_custom_call.1} parent=1 // pred_region
      _
    $region5: #{tpu_custom_call.1} parent=1 // pred_fallthru
      _
    // Predicated region
    $region6: #{tpu_custom_call.1} parent=1 // pred_check
      _
    $region7: #{tpu_custom_call.1} parent=1 // pred_check_branch
      %12 = sbr.rel (0) target = $region9
    $region8: #{tpu_custom_call.1} parent=1 // pred_region
      _
    $region9: #{tpu_custom_call.1} parent=1 // pred_fallthru
      _
    // Predicated region
    $region10: #{tpu_custom_call.1} parent=1 // pred_check
      _
    $region11: #{tpu_custom_call.1} parent=1 // pred_check_branch
      %14 = sbr.rel (0) target = $region13
    $region12: #{tpu_custom_call.1} parent=1 // pred_region
      _
    $region13: #{tpu_custom_call.1} parent=1 // pred_fallthru
      _
    %v15 = vld [vmem:[%s0] sm:$0xff]
    %v16 = vld [vmem:[%s0 + $0x8] sm:$0xff]
    %v17 = vcvt.f32.s32.to.zero.pseudo %v15
    %v18 = vlaneseq
    %v19 = vshrl.u32 %v18, 7
    %v20 = vadd.s32 %v19, 8
    %v21 = vadd.s32 %v19, 16
    %v22 = vadd.s32 %v19, 24
    %v23 = vadd.s32 %v19, 32
    %v24 = vperm.slane %v17, 0
    %vm25 = vcmp.eq.s32.totalorder %v19, %v24
    %vm26 = vcmp.eq.s32.totalorder %v20, %v24
    %vm27 = vcmp.eq.s32.totalorder %v21, %v24
    %vm28 = vcmp.eq.s32.totalorder %v22, %v24
    %vm29 = vcmp.eq.s32.totalorder %v23, %v24
    %v30 = vadd.s32 %v17, 8
    %v31 = vperm.slane %v30, 1
    %vm32 = vcmp.eq.s32.totalorder %v19, %v31
    %vm33 = vcmp.eq.s32.totalorder %v20, %v31
    %vm34 = vcmp.eq.s32.totalorder %v21, %v31
    %vm35 = vcmp.eq.s32.totalorder %v22, %v31
    %vm36 = vcmp.eq.s32.totalorder %v23, %v31
    %vm37 = vmor %vm25, %vm32
    %vm38 = vmor %vm26, %vm33
    %vm39 = vmor %vm27, %vm34
    %vm40 = vmor %vm28, %vm35
    %vm41 = vmor %vm29, %vm36
    %v42 = vadd.s32 %v17, 14
    %v43 = vperm.slane %v42, 2
    %vm44 = vcmp.eq.s32.totalorder %v19, %v43
    %vm45 = vcmp.eq.s32.totalorder %v20, %v43
    %vm46 = vcmp.eq.s32.totalorder %v21, %v43
    %vm47 = vcmp.eq.s32.totalorder %v22, %v43
    %vm48 = vcmp.eq.s32.totalorder %v23, %v43
    %vm49 = vmor %vm37, %vm44
    %vm50 = vmor %vm38, %vm45
    %vm51 = vmor %vm39, %vm46
    %vm52 = vmor %vm40, %vm47
    %vm53 = vmor %vm41, %vm48
    %v54 = vadd.s32 %v17, 32
    %v55 = vperm.slane %v54, 3
    %vm56 = vcmp.eq.s32.totalorder %v19, %v55
    %vm57 = vcmp.eq.s32.totalorder %v20, %v55
    %vm58 = vcmp.eq.s32.totalorder %v21, %v55
    %vm59 = vcmp.eq.s32.totalorder %v22, %v55
    %vm60 = vcmp.eq.s32.totalorder %v23, %v55
    %vm61 = vmor %vm49, %vm56
    %vm62 = vmor %vm50, %vm57
    %vm63 = vmor %vm51, %vm58
    %vm64 = vmor %vm52, %vm59
    %vm65 = vmor %vm53, %vm60
    %v66 = vsel %vm61, 1, 0
    %v67 = vsel %vm62, 1, 0
    %v68 = vsel %vm63, 1, 0
    %v69 = vsel %vm64, 1, 0
    %v70 = vsel %vm65, 1, 0
    %v71 = vcvt.s32.f32 %v66
    %v72 = vcvt.s32.f32 %v67
    %v73 = vcvt.s32.f32 %v68
    %v74 = vcvt.s32.f32 %v69
    %v75 = vcvt.s32.f32 %v70
    %v76 = vld [vmem:[%s1] sm:$0xff]
    %v77 = vld [vmem:[%s2] sm:$0xff]
    %v78 = vld [vmem:[%s2 + $0x8] sm:$0xff]
    %v79 = vld [vmem:[%s2 + $0x10] sm:$0xff]
    %v80 = vld [vmem:[%s2 + $0x18] sm:$0xff]
    %vm81 = vcmask 523264
    %v83 = vsel %vm81, %v77, 0
    %v86 = vsel %vm81, %v78, 0
    %v89 = vsel %vm81, %v79, 0
    %v92 = vsel %vm81, %v80, 0
    %94 = vmatpush.msra.mxu0 0.0
    %95 = vmatpush.msra.mxu0 0.0
    %96 = vmatpush.msra.mxu0 0.0
    %97 = vmatpush.msra.mxu0 0.0
    %98 = vmatpush.msra.mxu0 0.0
    %99 = vmatpush.msra.mxu0 0.0
    %100 = vmatpush.msra.mxu0 0.0
    %101 = vmatpush.msra.mxu0 0.0
    %102 = vmatpush.msra.mxu0 %v76
    %103 = vmatpush.msra.mxu0 %v16
    %104 = vmatpush.msra.mxu0 %v15
    %105 = vmatpush.msra.mxu0 %v75
    %106 = vmatpush.msra.mxu0 %v74
    %107 = vmatpush.msra.mxu0 %v73
    %108 = vmatpush.msra.mxu0 %v72
    %109 = vmatpush.msra.mxu0 %v71
    %110 = vmatmul.f32.gmra.mxu0 %v83
    %v111 = vpop.f32.mrf.mxu0
    %v112 = vadd.f32 0.0, %v111
    %113 = vmatmul.f32.gmra.mxu0 %v86
    %v114 = vpop.f32.mrf.mxu0
    %v115 = vadd.f32 0.0, %v114
    %116 = vmatmul.f32.gmra.mxu0 %v89
    %v117 = vpop.f32.mrf.mxu0
    %v118 = vadd.f32 0.0, %v117
    %119 = vmatmul.f32.gmra.mxu0 %v92
    %v120 = vpop.f32.mrf.mxu0
    %v121 = vadd.f32 0.0, %v120
    %122 = vdwg.mxu0
    %v123 = vmax.f32 %v112, 0.0
    %v124 = vmax.f32 %v115, 0.0
    %v125 = vmax.f32 %v118, 0.0
    %v126 = vmax.f32 %v121, 0.0
    %v127 = vld [vmem:[%s2 + $0x20] sm:$0xff]
    %v128 = vld [vmem:[%s2 + $0x28] sm:$0xff]
    %v129 = vld [vmem:[%s2 + $0x30] sm:$0xff]
    %v130 = vld [vmem:[%s2 + $0x38] sm:$0xff]
    %v132 = vsel %vm81, %v127, 0
    %v135 = vsel %vm81, %v128, 0
    %v138 = vsel %vm81, %v129, 0
    %v141 = vsel %vm81, %v130, 0
    %143 = vmatpush.msra.mxu0 0.0
    %144 = vmatpush.msra.mxu0 0.0
    %145 = vmatpush.msra.mxu0 0.0
    %146 = vmatpush.msra.mxu0 0.0
    %147 = vmatpush.msra.mxu0 0.0
    %148 = vmatpush.msra.mxu0 0.0
    %149 = vmatpush.msra.mxu0 0.0
    %150 = vmatpush.msra.mxu0 0.0
    %151 = vmatpush.msra.mxu0 1.0
    %152 = vmatpush.msra.mxu0 1.0
    %153 = vmatpush.msra.mxu0 1.0
    %154 = vmatpush.msra.mxu0 1.0
    %155 = vmatpush.msra.mxu0 %v126
    %156 = vmatpush.msra.mxu0 %v125
    %157 = vmatpush.msra.mxu0 %v124
    %158 = vmatpush.msra.mxu0 %v123
    %159 = vmatmul.f32.gmra.mxu0 %v132
    %v160 = vpop.f32.mrf.mxu0
    %v161 = vadd.f32 0.0, %v160
    %162 = vmatmul.f32.gmra.mxu0 %v135
    %v163 = vpop.f32.mrf.mxu0
    %v164 = vadd.f32 0.0, %v163
    %165 = vmatmul.f32.gmra.mxu0 %v138
    %v166 = vpop.f32.mrf.mxu0
    %v167 = vadd.f32 0.0, %v166
    %168 = vmatmul.f32.gmra.mxu0 %v141
    %v169 = vpop.f32.mrf.mxu0
    %v170 = vadd.f32 0.0, %v169
    %171 = vdwg.mxu0
    %v172 = vmax.f32 %v161, 0.0
    %v173 = vmax.f32 %v164, 0.0
    %v174 = vmax.f32 %v167, 0.0
    %v175 = vmax.f32 %v170, 0.0
    %v176 = vld [vmem:[%s2 + $0x40] sm:$0xff]
    %v177 = vld [vmem:[%s2 + $0x48] sm:$0xff]
    %v178 = vld [vmem:[%s2 + $0x50] sm:$0xff]
    %v179 = vld [vmem:[%s2 + $0x58] sm:$0xff]
    %v180 = vld [vmem:[%s2 + $0x60] sm:$0x1]
    %182 = vset.pattern.permute.xlu0 0
    %183 = vperm.xlu0 %182, %v176
    %v184 = vpop.permute.xlu0 %183
    %187 = vset.pattern.permute.xlu0 0
    %188 = vperm.xlu0 %187, %v177
    %v189 = vpop.permute.xlu0 %188
    %192 = vset.pattern.permute.xlu0 0
    %193 = vperm.xlu0 %192, %v178
    %v194 = vpop.permute.xlu0 %193
    %197 = vset.pattern.permute.xlu0 0
    %198 = vperm.xlu0 %197, %v179
    %v199 = vpop.permute.xlu0 %198
    %v201 = vmul.f32 %v172, %v184
    %v202 = vmul.f32 %v173, %v189
    %v203 = vmul.f32 %v174, %v194
    %v204 = vmul.f32 %v175, %v199
    %v205 = vadd.f32 %v201, %v202
    %v206 = vadd.f32 %v205, %v203
    %v207 = vadd.f32 %v206, %v204
    %v208 = vrot.slane %v207, 4
    %v209 = vadd.f32 %v207, %v208
    %v210 = vrot.slane %v209, 2
    %v211 = vadd.f32 %v209, %v210
    %v212 = vrot.slane %v211, 1
    %v213 = vadd.f32 %v211, %v212
    %215 = vset.pattern.permute.xlu0 0
    %216 = vperm.xlu0 %215, %v180
    %v217 = vpop.permute.xlu0 %216
    %v219 = vadd.f32 %v213, %v217
    %220 = vst [vmem:[#allocation2] sm:$0x1] %v219
    // Predicated region
    $region14: #{tpu_custom_call.1} parent=1 // pred_check
      _
    $region15: #{tpu_custom_call.1} parent=1 // pred_check_branch
      %222 = sbr.rel (0) target = $region17
    $region16: #{tpu_custom_call.1} parent=1 // pred_region
      %224 = vsyncadd [#allocation3], 0
      %s226 = sshll.u32 [#allocation2], 4
      %s227 = int_to_ptr.vmem [resolvable:$true] %s226
      %s228 = sshll.u32 %s3, 4
      %s229 = int_to_ptr.hbm [resolvable:$true] %s228
      %231 = dma.vmem_to_hbm [thread:$0]  %s227, 16, %s229, [#allocation3]
    $region17: #{tpu_custom_call.1} parent=1 // pred_fallthru
      _
    // Predicated region
    $region18: #{tpu_custom_call.1} parent=1 // pred_check
      _
    $region19: #{tpu_custom_call.1} parent=1 // pred_check_branch
      %233 = sbr.rel (0) target = $region21
    $region20: #{tpu_custom_call.1} parent=1 // pred_region
      %235 = dma.done [#allocation3], 16
    $region21: #{tpu_custom_call.1} parent=1 // pred_fallthru
      _
    %236 = vsyncpa [#allocation3], 1

</llo_original>
